<compile_context>
chip_gen: v6e
topology: v6e:2x2x1
jax: 0.10.0
libtpu: 0.0.40
codegen_flags: <defaults>
</compile_context>

<pallas_src>
import functools

import jax
import jax.numpy as jnp
import numpy as np
from jax import lax
from jax.experimental import pallas as pl
from jax.experimental.pallas import tpu as pltpu


# ----------------------------------------------------------------------------------
# Kernel 1: GatingNetwork.forward  (cls token -> Linear -> softmax)
# ----------------------------------------------------------------------------------
def gating_network_kernel(x_ref, wg_ref, bg_ref, g_ref):
    batch = x_ref.shape[0]
    # cls_token = x[:, 0]  (built from leading-index row loads; B is tiny/static)
    cls = jnp.concatenate([x_ref[b, 0:1, :] for b in range(batch)], axis=0)   # (B, D)
    logits = jnp.dot(cls, wg_ref[...], preferred_element_type=jnp.float32) + bg_ref[...]
    logits = logits - jnp.max(logits, axis=-1, keepdims=True)
    p = jnp.exp(logits)
    g_ref[...] = p / jnp.sum(p, axis=-1, keepdims=True)                       # exact softmax


def gating_network(x, wg, bg):
    B, N, D = x.shape
    E = wg.shape[0]
    vmem = pl.BlockSpec(memory_space=pltpu.MemorySpace.VMEM)
    return pl.pallas_call(
        gating_network_kernel,
        out_shape=jax.ShapeDtypeStruct((B, E), jnp.float32),
        in_specs=[vmem, vmem, vmem],
        out_specs=vmem,
        compiler_params=pltpu.CompilerParams(vmem_limit_bytes=32 * 1024 * 1024),
    )(x, wg.T, bg.reshape(1, E))


# ----------------------------------------------------------------------------------
# Kernel 2: gated mixture-of-experts QKV projection + MHA + output projection
# ----------------------------------------------------------------------------------
def cond_mha_kernel(num_heads, num_experts, batch, seq,
                    x_ref, g_ref, w_ref, b_ref, wo_ref, bo_ref,
                    out_ref, attn_ref):
    bn, d = x_ref.shape
    hd = d // num_heads
    d3 = 3 * d
    scale = hd ** -0.5

    # One wide MXU matmul: every expert's fused [Wq|Wk|Wv] at once.   (B*N, E*3D)
    p_all = jnp.dot(x_ref[...], w_ref[...], preferred_element_type=jnp.float32)

    # Gate-mix the per-expert *activations* (identical to mixing weights, but ~24x less VPU work).
    g = g_ref[...]                                  # (B*N, E) per-row gates
    b_all = b_ref[...]                              # (E, 3D) per-expert fused biases
    qkv = g[:, 0:1] * (p_all[:, 0:d3] + b_all[0:1, :])
    for e in range(1, num_experts):
        qkv = qkv + g[:, e:e + 1] * (p_all[:, e * d3:(e + 1) * d3] + b_all[e:e + 1, :])
    # qkv columns: [0:D]=Q, [D:2D]=K, [2D:3D]=V      (all slices 128-lane aligned, D=256)

    for b in range(batch):
        r = b * seq
        acc = bo_ref[...]                           # (1, D), broadcasts over rows
        for h in range(num_heads):
            c = h * hd
            qh = qkv[r:r + seq, c:c + hd]
            kh = qkv[r:r + seq, d + c:d + c + hd]
            vh = qkv[r:r + seq, 2 * d + c:2 * d + c + hd]
            s = lax.dot_general(qh, kh, (((1,), (1,)), ((), ())),
                                preferred_element_type=jnp.float32) * scale   # (N, N)
            s = s - jnp.max(s, axis=-1, keepdims=True)
            p = jnp.exp(s)
            a = p * pl.reciprocal(jnp.sum(p, axis=-1, keepdims=True), approx=True)
            attn_ref[b, h] = a
            ctx_h = jnp.dot(a, vh, preferred_element_type=jnp.float32)        # (N, hd)
            # Accumulate the output projection per head (no concatenate / no extra copy).
            acc = acc + jnp.dot(ctx_h, wo_ref[c:c + hd, :],
                                preferred_element_type=jnp.float32)           # (N, D)
        out_ref[r:r + seq, :] = acc                                           # lane-dense store


def conditional_mha(x, gating, params, num_heads):
    B, N, D = x.shape
    E = gating.shape[1]

    # ---- wrapper-side glue (layout only, one-time) ----
    wq_t = jnp.transpose(params["wq"], (0, 2, 1))       # (E, D_in, D_out)
    wk_t = jnp.transpose(params["wk"], (0, 2, 1))
    wv_t = jnp.transpose(params["wv"], (0, 2, 1))
    # (D, E*3D): per expert the fused [Wq | Wk | Wv] block.
    w_big = jnp.concatenate(
        [jnp.concatenate([wq_t[e], wk_t[e], wv_t[e]], axis=1) for e in range(E)], axis=1)
    # (E, 3D): matching fused biases.
    b_big = jnp.stack(
        [jnp.concatenate([params["bq"][e], params["bk"][e], params["bv"][e]]) for e in range(E)],
        axis=0)
    wo_t = params["wo"].T                               # (D, D)
    bo = params["bo"].reshape(1, D)
    x_flat = x.reshape(B * N, D)                        # collapse batch: single grid step
    g_rows = jnp.repeat(gating, N, axis=0)              # (B*N, E) per-row gates

    vmem = pl.BlockSpec(memory_space=pltpu.MemorySpace.VMEM)
    out_flat, attn = pl.pallas_call(
        functools.partial(cond_mha_kernel, num_heads, E, B, N),
        out_shape=(jax.ShapeDtypeStruct((B * N, D), jnp.float32),
                   jax.ShapeDtypeStruct((B, num_heads, N, N), jnp.float32)),
        in_specs=[vmem] * 6,
        out_specs=(vmem, vmem),
        compiler_params=pltpu.CompilerParams(vmem_limit_bytes=32 * 1024 * 1024),
    )(x_flat, g_rows, w_big, b_big, wo_t, bo)
    return out_flat.reshape(B, N, D), attn


# ----------------------------------------------------------------------------------
# Pure-JAX reference (mirrors the PyTorch modules)
# ----------------------------------------------------------------------------------
def reference(x, wg, bg, p, num_heads):
    B, N, D = x.shape
    hd = D // num_heads
    # GatingNetwork.forward (the spec): softmax(Linear(x[:, 0]))
    gating = jax.nn.softmax(x[:, 0] @ wg.T + bg, axis=-1)

    def mix_proj(W, b):
        proj = jnp.einsum("bnd,eod->ebno", x, W) + b[:, None, None, :]        # (E,B,N,D)
        return jnp.sum(gating.T[:, :, None, None] * proj, axis=0)

    Q = mix_proj(p["wq"], p["bq"])
    K = mix_proj(p["wk"], p["bk"])
    V = mix_proj(p["wv"], p["bv"])

    def split(t):
        return t.reshape(B, N, num_heads, hd).transpose(0, 2, 1, 3)

    Qh, Kh, Vh = split(Q), split(K), split(V)
    scores = jnp.einsum("bhqd,bhkd->bhqk", Qh, Kh) / (hd ** 0.5)
    attn = jax.nn.softmax(scores, axis=-1)
    ctx = jnp.einsum("bhqk,bhkd->bhqd", attn, Vh)
    ctx = ctx.transpose(0, 2, 1, 3).reshape(B, N, D)
    out = ctx @ p["wo"].T + p["bo"]
    return gating, out, attn


if __name__ == "__main__":
    B, N, D = 2, 8, 256
    num_heads = 2          # head_dim = 128 (lane-aligned)
    num_experts = 3

    key = jax.random.PRNGKey(0)
    keys = jax.random.split(key, 12)
    bound = 1.0 / np.sqrt(D)

    def u(k, shape):
        return jax.random.uniform(k, shape, jnp.float32, -bound, bound)

    params = {
        "wq": u(keys[0], (num_experts, D, D)), "bq": u(keys[1], (num_experts, D)),
        "wk": u(keys[2], (num_experts, D, D)), "bk": u(keys[3], (num_experts, D)),
        "wv": u(keys[4], (num_experts, D, D)), "bv": u(keys[5], (num_experts, D)),
        "wo": u(keys[6], (D, D)),              "bo": u(keys[7], (D,)),
    }
    wg = u(keys[9], (num_experts, D))          # GatingNetwork Linear weight (E, D)
    bg = u(keys[10], (num_experts,))           # GatingNetwork Linear bias   (E,)
    x = jax.random.normal(keys[8], (B, N, D), jnp.float32)

    gating = gating_network(x, wg, bg)                          # Pallas kernel 1 (the spec)
    out, attn = conditional_mha(x, gating, params, num_heads)   # Pallas kernel 2 (improved)
    jax.block_until_ready((gating, out, attn))

    g_ref, out_ref, attn_ref = reference(x, wg, bg, params, num_heads)
    np.testing.assert_allclose(np.asarray(gating), np.asarray(g_ref), rtol=1e-4, atol=1e-4)
    # approx-reciprocal softmax normalisation -> slightly looser tolerances (per review).
    np.testing.assert_allclose(np.asarray(out), np.asarray(out_ref), rtol=5e-3, atol=2e-3)
    np.testing.assert_allclose(np.asarray(attn), np.asarray(attn_ref), rtol=5e-3, atol=2e-3)

    print("KERNEL_OK")
</pallas_src>

<mosaic_0001>
module attributes {stable_mosaic.version = 11 : i64} {
  func.func @gating_network_kernel(%arg0: memref<2x8x256xf32, #tpu.memory_space<vmem>>, %arg1: memref<256x3xf32, #tpu.memory_space<vmem>>, %arg2: memref<1x3xf32, #tpu.memory_space<vmem>>, %arg3: memref<2x3xf32, #tpu.memory_space<vmem>>) attributes {dimension_semantics = [], scalar_prefetch = 0 : i64, scratch_operands = 0 : i64, tpu.core_type = #tpu.core_type<tc>} {
    %c0 = arith.constant 0 : index
    %c0_0 = arith.constant 0 : index
    %c0_1 = arith.constant 0 : index
    %0 = vector.load %arg0[%c0, %c0_0, %c0_1] : memref<2x8x256xf32, #tpu.memory_space<vmem>>, vector<1x1x256xf32>
    %1 = vector.shape_cast %0 : vector<1x1x256xf32> to vector<1x256xf32>
    %c1 = arith.constant 1 : index
    %c0_2 = arith.constant 0 : index
    %c0_3 = arith.constant 0 : index
    %2 = vector.load %arg0[%c1, %c0_2, %c0_3] : memref<2x8x256xf32, #tpu.memory_space<vmem>>, vector<1x1x256xf32>
    %3 = vector.shape_cast %2 : vector<1x1x256xf32> to vector<1x256xf32>
    %4 = tpu.concatenate %1, %3 in 0 : vector<1x256xf32>, vector<1x256xf32> -> vector<2x256xf32>
    %c0_4 = arith.constant 0 : index
    %c0_5 = arith.constant 0 : index
    %5 = vector.load %arg1[%c0_4, %c0_5] : memref<256x3xf32, #tpu.memory_space<vmem>>, vector<256x3xf32>
    %cst = arith.constant dense<0.000000e+00> : vector<2x3xf32>
    %6 = tpu.matmul %4, %5, %cst {dimension_numbers = #tpu.dot_dimension_numbers<[1], [0], [0], [1], [0, 0, 1, 1], [], []>} : vector<2x256xf32>, vector<256x3xf32>, vector<2x3xf32> -> vector<2x3xf32>
    %c0_6 = arith.constant 0 : index
    %c0_7 = arith.constant 0 : index
    %7 = vector.load %arg2[%c0_6, %c0_7] : memref<1x3xf32, #tpu.memory_space<vmem>>, vector<1x3xf32>
    %8 = vector.broadcast %7 : vector<1x3xf32> to vector<2x3xf32>
    %9 = arith.addf %6, %8 : vector<2x3xf32>
    %cst_8 = arith.constant dense<0xFF800000> : vector<2xf32>
    %10 = vector.multi_reduction <maximumf>, %9, %cst_8 [1] : vector<2x3xf32> to vector<2xf32>
    %11 = vector.shape_cast %10 : vector<2xf32> to vector<2x1xf32>
    %12 = vector.broadcast %11 : vector<2x1xf32> to vector<2x3xf32>
    %13 = arith.subf %9, %12 : vector<2x3xf32>
    %14 = math.exp %13 : vector<2x3xf32>
    %cst_9 = arith.constant dense<0.000000e+00> : vector<2xf32>
    %15 = vector.multi_reduction <add>, %14, %cst_9 [1] : vector<2x3xf32> to vector<2xf32>
    %16 = vector.shape_cast %15 : vector<2xf32> to vector<2x1xf32>
    %17 = vector.broadcast %16 : vector<2x1xf32> to vector<2x3xf32>
    %18 = arith.divf %14, %17 : vector<2x3xf32>
    %c0_10 = arith.constant 0 : index
    %c0_11 = arith.constant 0 : index
    %19 = vector.load %arg3[%c0_10, %c0_11] : memref<2x3xf32, #tpu.memory_space<vmem>>, vector<2x3xf32>
    tpu.vector_store %arg3[%c0_10, %c0_11], %18 {strides = array<i32>} : memref<2x3xf32, #tpu.memory_space<vmem>>, vector<2x3xf32>,
    return
  }
}

</mosaic_0001>

<llo_original>
// kernel: tpu_custom_call.1
$region0: #{tpu_custom_call.1}
  #allocation0 [shape = 'u32[]', space=smem, size = 0x4, offset = 0x4, fixed_abs, tag = 'smem constant byte address 0x4 - core index']
  #allocation1 [shape = 'u32[144,128]{1,0:T(1,128)}', space=vmem, size = 0x12000, scoped, tag = 'internal scratch']
  %s0 = inlined_call_operand.vmem [shape: f32[2,8,256], index: 0, kind: input, shape index: {}]
  %s1 = inlined_call_operand.vmem [shape: f32[256,3], index: 1, kind: input, shape index: {}]
  %s2 = inlined_call_operand.vmem [shape: f32[1,3], index: 2, kind: input, shape index: {}]
  %s3 = inlined_call_operand.hbm [shape: f32[2,3], index: 3, kind: output, shape index: {}]
  %s4 = sld [smem:[#allocation0]]
  $region22: #{tpu_custom_call.1} parent=0
    _
  %s6 = ssub.s32 1, %s4
  %s7 = scalar_select 0, %s6, %s4
  $region1: #{tpu_custom_call.1} parent=0
    #allocation2 [shape = 'u8[1024]{0}', space=vmem, size = 0x400, scoped, tag = 'output window, operand 0, single buffered']
    #allocation3 [shape = 's32[1]{0}', space=sflag, size = 0x4, scoped, tag = 'scoped memory for tpu_custom_call.1']
    %8 = vsyncpa [#allocation3], 0
    // Predicated region
    $region2: #{tpu_custom_call.1} parent=1 // pred_check
      _
    $region3: #{tpu_custom_call.1} parent=1 // pred_check_branch
      %10 = sbr.rel (0) target = $region5
    $region4: #{tpu_custom_call.1} parent=1 // pred_region
      _
    $region5: #{tpu_custom_call.1} parent=1 // pred_fallthru
      _
    // Predicated region
    $region6: #{tpu_custom_call.1} parent=1 // pred_check
      _
    $region7: #{tpu_custom_call.1} parent=1 // pred_check_branch
      %12 = sbr.rel (0) target = $region9
    $region8: #{tpu_custom_call.1} parent=1 // pred_region
      _
    $region9: #{tpu_custom_call.1} parent=1 // pred_fallthru
      _
    // Predicated region
    $region10: #{tpu_custom_call.1} parent=1 // pred_check
      _
    $region11: #{tpu_custom_call.1} parent=1 // pred_check_branch
      %14 = sbr.rel (0) target = $region13
    $region12: #{tpu_custom_call.1} parent=1 // pred_region
      _
    $region13: #{tpu_custom_call.1} parent=1 // pred_fallthru
      _
    %v15 = vld [vmem:[%s0] ss:$8 sm:$0x3]
    %s16 = scalar_lea.vmem %s0, 16
    %v17 = vld [vmem:[%s16] ss:$8 sm:$0x3]
    %v19 = vlaneseq
    %v20 = vshrl.u32 %v19, 7
    %v21 = vsub.s32 0, %v20
    %v22 = vrot.slane %v15, %v21
    %v23 = vlaneseq
    %v24 = vshrl.u32 %v23, 7
    %v25 = vsub.s32 1, %v24
    %v26 = vrot.slane %v15, %v25
    %v30 = vlaneseq
    %v31 = vshrl.u32 %v30, 7
    %v32 = vsub.s32 0, %v31
    %v33 = vrot.slane %v17, %v32
    %v34 = vlaneseq
    %v35 = vshrl.u32 %v34, 7
    %v36 = vsub.s32 1, %v35
    %v37 = vrot.slane %v17, %v36
    %vm40 = vcmask 1040384
    %v41 = vsel %vm40, %v22, %v33
    %v42 = vsel %vm40, %v26, %v37
    %v43 = vld [vmem:[%s1] sm:$0xff]
    %v44 = vld [vmem:[%s1 + $0x8] sm:$0xff]
    %v45 = vld [vmem:[%s1 + $0x10] sm:$0xff]
    %v46 = vld [vmem:[%s1 + $0x18] sm:$0xff]
    %v47 = vld [vmem:[%s1 + $0x20] sm:$0xff]
    %v48 = vld [vmem:[%s1 + $0x28] sm:$0xff]
    %v49 = vld [vmem:[%s1 + $0x30] sm:$0xff]
    %v50 = vld [vmem:[%s1 + $0x38] sm:$0xff]
    %v51 = vld [vmem:[%s1 + $0x40] sm:$0xff]
    %v52 = vld [vmem:[%s1 + $0x48] sm:$0xff]
    %v53 = vld [vmem:[%s1 + $0x50] sm:$0xff]
    %v54 = vld [vmem:[%s1 + $0x58] sm:$0xff]
    %v55 = vld [vmem:[%s1 + $0x60] sm:$0xff]
    %v56 = vld [vmem:[%s1 + $0x68] sm:$0xff]
    %v57 = vld [vmem:[%s1 + $0x70] sm:$0xff]
    %v58 = vld [vmem:[%s1 + $0x78] sm:$0xff]
    %v59 = vld [vmem:[%s1 + $0x80] sm:$0xff]
    %v60 = vld [vmem:[%s1 + $0x88] sm:$0xff]
    %v61 = vld [vmem:[%s1 + $0x90] sm:$0xff]
    %v62 = vld [vmem:[%s1 + $0x98] sm:$0xff]
    %v63 = vld [vmem:[%s1 + $0xa0] sm:$0xff]
    %v64 = vld [vmem:[%s1 + $0xa8] sm:$0xff]
    %v65 = vld [vmem:[%s1 + $0xb0] sm:$0xff]
    %v66 = vld [vmem:[%s1 + $0xb8] sm:$0xff]
    %v67 = vld [vmem:[%s1 + $0xc0] sm:$0xff]
    %v68 = vld [vmem:[%s1 + $0xc8] sm:$0xff]
    %v69 = vld [vmem:[%s1 + $0xd0] sm:$0xff]
    %v70 = vld [vmem:[%s1 + $0xd8] sm:$0xff]
    %v71 = vld [vmem:[%s1 + $0xe0] sm:$0xff]
    %v72 = vld [vmem:[%s1 + $0xe8] sm:$0xff]
    %v73 = vld [vmem:[%s1 + $0xf0] sm:$0xff]
    %v74 = vld [vmem:[%s1 + $0xf8] sm:$0xff]
    %v75 = vld [vmem:[%s2] sm:$0x1]
    %v77 = vlaneseq
    %v78 = vshrl.u32 %v77, 7
    %v79 = vsub.s32 0, %v78
    %v80 = vrot.slane %v75, %v79
    %82 = vmatprep.subr.mxu0 0.0
    %83 = vmatpush1.msra.mxu0 %v58
    %84 = vmatprep.subr.mxu0 0.0
    %85 = vmatpush1.msra.mxu0 %v57
    %86 = vmatprep.subr.mxu0 0.0
    %87 = vmatpush1.msra.mxu0 %v56
    %88 = vmatprep.subr.mxu0 0.0
    %89 = vmatpush1.msra.mxu0 %v55
    %90 = vmatprep.subr.mxu0 0.0
    %91 = vmatpush1.msra.mxu0 %v54
    %92 = vmatprep.subr.mxu0 0.0
    %93 = vmatpush1.msra.mxu0 %v53
    %94 = vmatprep.subr.mxu0 0.0
    %95 = vmatpush1.msra.mxu0 %v52
    %96 = vmatprep.subr.mxu0 0.0
    %97 = vmatpush1.msra.mxu0 %v51
    %98 = vmatprep.subr.mxu0 0.0
    %99 = vmatpush1.msra.mxu0 %v50
    %100 = vmatprep.subr.mxu0 0.0
    %101 = vmatpush1.msra.mxu0 %v49
    %102 = vmatprep.subr.mxu0 0.0
    %103 = vmatpush1.msra.mxu0 %v48
    %104 = vmatprep.subr.mxu0 0.0
    %105 = vmatpush1.msra.mxu0 %v47
    %106 = vmatprep.subr.mxu0 0.0
    %107 = vmatpush1.msra.mxu0 %v46
    %108 = vmatprep.subr.mxu0 0.0
    %109 = vmatpush1.msra.mxu0 %v45
    %110 = vmatprep.subr.mxu0 0.0
    %111 = vmatpush1.msra.mxu0 %v44
    %112 = vmatprep.subr.mxu0 0.0
    %113 = vmatpush1.msra.mxu0 %v43
    %114 = vmatprep.subr.mxu0 0.0
    %115 = vmatpush2.msra.mxu0 %v74
    %116 = vmatprep.subr.mxu0 0.0
    %117 = vmatpush2.msra.mxu0 %v73
    %118 = vmatprep.subr.mxu0 0.0
    %119 = vmatpush2.msra.mxu0 %v72
    %120 = vmatprep.subr.mxu0 0.0
    %121 = vmatpush2.msra.mxu0 %v71
    %122 = vmatprep.subr.mxu0 0.0
    %123 = vmatpush2.msra.mxu0 %v70
    %124 = vmatprep.subr.mxu0 0.0
    %125 = vmatpush2.msra.mxu0 %v69
    %126 = vmatprep.subr.mxu0 0.0
    %127 = vmatpush2.msra.mxu0 %v68
    %128 = vmatprep.subr.mxu0 0.0
    %129 = vmatpush2.msra.mxu0 %v67
    %130 = vmatprep.subr.mxu0 0.0
    %131 = vmatpush2.msra.mxu0 %v66
    %132 = vmatprep.subr.mxu0 0.0
    %133 = vmatpush2.msra.mxu0 %v65
    %134 = vmatprep.subr.mxu0 0.0
    %135 = vmatpush2.msra.mxu0 %v64
    %136 = vmatprep.subr.mxu0 0.0
    %137 = vmatpush2.msra.mxu0 %v63
    %138 = vmatprep.subr.mxu0 0.0
    %139 = vmatpush2.msra.mxu0 %v62
    %140 = vmatprep.subr.mxu0 0.0
    %141 = vmatpush2.msra.mxu0 %v61
    %142 = vmatprep.subr.mxu0 0.0
    %143 = vmatpush2.msra.mxu0 %v60
    %144 = vmatprep.subr.mxu0 0.0
    %145 = vmatpush2.msra.mxu0 %v59
    %146 = vmatprep.mubr.f32.mxu0 %v42
    %147 = vmatmul.mubr.f32.gmra.mxu0 %v41
    %v148 = vpop.f32.mrf.mxu0
    %v149 = vadd.f32 %v80, %v148
    %v150 = vpop.f32.mrf.mxu0
    %151 = vdwg.mxu0
    %vm152 = vcmask 17408
    %v153 = vsel %vm152, %v149, -inf
    %154 = vmax.xlane.f32.xlu0 %v153
    %v155 = vpop.xlane.xlu0 %154
    %v156 = vsub.f32 %v149, %v155
    %v157 = vmul.f32 %v156, 1.442695
    %v158 = vpow.pop %v157
    %v159 = vsel %vm152, %v158, 0.0
    %160 = vadd.xlane.f32.xlu0 %v159
    %v161 = vpop.xlane.xlu0 %160
    %v162 = vrcp.pop %v161
    %v163 = vmul.f32 %v158, %v162
    %164 = vst.msk [vmem:[#allocation2] sm:$0x3] %vm152, %v163
    // Predicated region
    $region14: #{tpu_custom_call.1} parent=1 // pred_check
      _
    $region15: #{tpu_custom_call.1} parent=1 // pred_check_branch
      %166 = sbr.rel (0) target = $region17
    $region16: #{tpu_custom_call.1} parent=1 // pred_region
      %s168 = ssub.s32 32, 32
      %169 = vsyncadd [#allocation3], %s168
      %s171 = sshll.u32 [#allocation2], 4
      %s172 = int_to_ptr.vmem [resolvable:$true] %s171
      %174 = dma.vmem_to_hbm [thread:$0]  %s172, 32, %s3, [#allocation3]
    $region17: #{tpu_custom_call.1} parent=1 // pred_fallthru
      _
    // Predicated region
    $region18: #{tpu_custom_call.1} parent=1 // pred_check
      _
    $region19: #{tpu_custom_call.1} parent=1 // pred_check_branch
      %176 = sbr.rel (0) target = $region21
    $region20: #{tpu_custom_call.1} parent=1 // pred_region
      %177 = dma.done [#allocation3], 32
    $region21: #{tpu_custom_call.1} parent=1 // pred_fallthru
      _
    %178 = vsyncpa [#allocation3], 1

</llo_original>
